<compile_context>
chip_gen: v7x
topology: tpu7x:2x2x1
jax: 0.10.0
libtpu: 0.0.40
codegen_flags: <defaults>
</compile_context>

<pallas_src>
import jax
import jax.numpy as jnp
from jax.experimental import pallas as pl
from jax.experimental.pallas import tpu as pltpu


def _relu_kernel(x_ref, o_ref):
    # Pure VPU elementwise max on the whole VMEM tile.
    o_ref[...] = jnp.maximum(x_ref[...], jnp.zeros((), x_ref.dtype))


def _cdiv(a: int, b: int) -> int:
    return -(-a // b)


def _target_block_bytes() -> int:
    """Per-generation streaming block target (amortize ~0.35us/step overhead
    against HBM bandwidth while staying well inside scoped VMEM)."""
    try:
        kind = jax.devices()[0].device_kind.lower()
    except Exception:
        return 4 << 20
    if "v5e" in kind or "v5 lite" in kind or "v5lite" in kind:
        return 2 << 20   # v5e: ~820 GB/s, 16 MiB default scoped VMEM
    if "v7" in kind:
        return 8 << 20   # v7x: 3.2 TB/s, 64 MiB physical VMEM/TC
    return 4 << 20       # v6e / v5p / default


def _balanced_rows_per_block(rows: int, bytes_per_row: int, align: int,
                             target_bytes: int) -> int:
    """Rows per block: <= target bytes, balanced across the grid, aligned."""
    total = rows * bytes_per_row
    max_tr = max(align, ((target_bytes // max(1, bytes_per_row)) // align) * align)
    n_blocks = _cdiv(rows, max_tr)
    # Keep >=4 grid steps (>=2 per TensorCore after megacore sharding of the
    # "parallel" axis) whenever the tensor is big enough that pipelined DMA
    # overlap matters; tiny tensors take a single block.
    if total >= (1 << 20) and rows >= 4 * align:
        n_blocks = max(n_blocks, 4)
    tr = _cdiv(_cdiv(rows, n_blocks), align) * align
    if tr >= rows:
        tr = rows  # single full-extent block (always a legal block dim)
    return tr


def relu_pallas(x: jax.Array, donate: bool = False) -> jax.Array:
    """ReLU(x) with identical shape/dtype semantics as torch.nn.ReLU.

    `donate=True` aliases the input buffer to the output (the functional
    analogue of ReLU(inplace=True)); only use it if the caller no longer
    needs `x`.
    """
    if x.size == 0:
        return x
    orig_shape = x.shape
    if x.ndim == 0:
        return jnp.maximum(x, jnp.zeros((), x.dtype))

    # Layout-preserving view: keep the (8,128)-tiled trailing dims intact and
    # only collapse / peel size-1 leading dims, so XLA inserts no relayout
    # copies around the kernel.
    if x.ndim == 1:
        v = x.reshape(1, x.shape[0])
    elif x.ndim == 2:
        v = x
    else:
        v = x.reshape((-1,) + x.shape[-2:])
        if v.shape[0] == 1:
            # Squeeze the size-1 lead so we can tile the sublane dim instead.
            v = v.reshape(v.shape[-2:])

    itemsize = jnp.dtype(x.dtype).itemsize
    target = _target_block_bytes()

    if v.ndim == 3:
        lead, h, w = v.shape
        tr = _balanced_rows_per_block(lead, h * w * itemsize, 1, target)
        block_shape = (tr, h, w)          # trailing dims full extent -> legal
        index_map = lambda i: (i, 0, 0)
        grid = (_cdiv(lead, tr),)
        block_bytes = tr * h * w * itemsize
    else:
        h, w = v.shape
        tr = _balanced_rows_per_block(h, w * itemsize, 8, target)
        block_shape = (tr, w)             # tr multiple of 8 or full extent
        index_map = lambda i: (i, 0)
        grid = (_cdiv(h, tr),)
        block_bytes = tr * w * itemsize

    out = pl.pallas_call(
        _relu_kernel,
        out_shape=jax.ShapeDtypeStruct(v.shape, v.dtype),
        grid=grid,
        in_specs=[pl.BlockSpec(block_shape, index_map)],
        out_specs=pl.BlockSpec(block_shape, index_map),
        compiler_params=pltpu.CompilerParams(
            dimension_semantics=("parallel",),
            # in + out, double-buffered, plus headroom; never below the
            # smallest (v5e) default so we only ever raise the limit.
            vmem_limit_bytes=max(16 << 20, 4 * block_bytes + (4 << 20)),
        ),
        input_output_aliases=({0: 0} if donate else {}),
    )(v)

    return out.reshape(orig_shape)


if __name__ == "__main__":
    key = jax.random.PRNGKey(0)

    # Small shape consistent with the module's 4-D NCHW input.
    x_small = jax.random.normal(key, (2, 4, 16, 16), dtype=jnp.float32)
    y_small = relu_pallas(x_small)
    jax.block_until_ready(y_small)
    assert y_small.shape == x_small.shape and y_small.dtype == x_small.dtype
    assert jnp.allclose(y_small, jnp.maximum(x_small, 0.0))

    # Module's actual shape (1, 224, 56, 56): layout-preserving collapse to
    # (224, 56, 56), balanced 4-step grid of (56, 56, 56) blocks.
    x_mod = jax.random.normal(key, (1, 224, 56, 56), dtype=jnp.float32)
    y_mod = relu_pallas(x_mod)
    jax.block_until_ready(y_mod)
    assert jnp.allclose(y_mod, jnp.maximum(x_mod, 0.0))

    # Awkward size: exercised without any pad/slice copies (trailing dims are
    # taken at full extent).
    x_odd = jax.random.normal(key, (3, 5, 7, 11), dtype=jnp.float32)
    y_odd = relu_pallas(x_odd)
    jax.block_until_ready(y_odd)
    assert jnp.allclose(y_odd, jnp.maximum(x_odd, 0.0))

    print("KERNEL_OK")
</pallas_src>

<mosaic_0001>
module attributes {stable_mosaic.version = 11 : i64} {
  func.func @_relu_kernel(%arg0: i32, %arg1: memref<8x16x16xf32, #tpu.memory_space<vmem>>, %arg2: memref<8x16x16xf32, #tpu.memory_space<vmem>>) attributes {dimension_semantics = [#tpu.dimension_semantics<parallel>], iteration_bounds = array<i64: 1>, scalar_prefetch = 0 : i64, scratch_operands = 0 : i64, tpu.core_type = #tpu.core_type<tc>, window_params = [{transform_indices = @transform_0, window_bounds = array<i64: 8, 16, 16>}, {transform_indices = @transform_1, window_bounds = array<i64: 8, 16, 16>}]} {
    %c0 = arith.constant 0 : index
    %c0_0 = arith.constant 0 : index
    %c0_1 = arith.constant 0 : index
    %0 = vector.load %arg1[%c0, %c0_0, %c0_1] : memref<8x16x16xf32, #tpu.memory_space<vmem>>, vector<8x16x16xf32>
    %cst = arith.constant 0.000000e+00 : f32
    %1 = vector.broadcast %cst : f32 to vector<8x16x16xf32>
    %2 = arith.maximumf %0, %1 : vector<8x16x16xf32>
    %c0_2 = arith.constant 0 : index
    %c0_3 = arith.constant 0 : index
    %c0_4 = arith.constant 0 : index
    %3 = vector.load %arg2[%c0_2, %c0_3, %c0_4] : memref<8x16x16xf32, #tpu.memory_space<vmem>>, vector<8x16x16xf32>
    tpu.vector_store %arg2[%c0_2, %c0_3, %c0_4], %2 {strides = array<i32>} : memref<8x16x16xf32, #tpu.memory_space<vmem>>, vector<8x16x16xf32>,
    return
  }
  func.func @transform_0(%arg0: i32) -> (i32, i32, i32) {
    %c0_i32 = arith.constant 0 : i32
    %c0_i32_0 = arith.constant 0 : i32
    %c0_i32_1 = arith.constant 0 : i32
    return %arg0, %c0_i32, %c0_i32_0 : i32, i32, i32
  }
  func.func @transform_1(%arg0: i32) -> (i32, i32, i32) {
    %c0_i32 = arith.constant 0 : i32
    %c0_i32_0 = arith.constant 0 : i32
    %c0_i32_1 = arith.constant 0 : i32
    return %arg0, %c0_i32, %c0_i32_0 : i32, i32, i32
  }
}

</mosaic_0001>

<llo_original>
// kernel: tpu_custom_call.1
$region0: #{tpu_custom_call.1}
  #allocation0 [shape = 'u32[]', space=smem, size = 0x4, offset = 0x4, fixed_abs, tag = 'smem constant byte address 0x4 - core index']
  #allocation1 [shape = 'u32[144,128]{1,0:T(1,128)}', space=vmem, size = 0x12000, scoped, tag = 'internal scratch']
  %s0 = inlined_call_operand.hbm [shape: f32[8,16,16], index: 0, kind: input, shape index: {}]
  %s1 = inlined_call_operand.hbm [shape: f32[8,16,16], index: 1, kind: output, shape index: {}]
  %s2 = sld [smem:[#allocation0]]
  $region18: #{tpu_custom_call.1} parent=0
    _
  %s4 = ssub.s32 1, %s2
  %s5 = scalar_select 0, %s4, %s2
  $region1: #{tpu_custom_call.1} parent=0
    #allocation2 [shape = 'u8[65536]{0}', space=vmem, size = 0x10000, scoped, tag = 'input window, operand 0, single buffered']
    #allocation3 [shape = 's32[1]{0}', space=sflag, size = 0x4, scoped, tag = 'scoped memory for tpu_custom_call.1']
    #allocation4 [shape = 's32[1]{0}', space=sflag, size = 0x4, scoped, tag = 'scoped memory for tpu_custom_call.1']
    #allocation5 [shape = 'u8[65536]{0}', space=vmem, size = 0x10000, scoped, tag = 'output window, operand 0, single buffered']
    %6 = vsyncpa [#allocation3], 0
    %7 = vsyncpa [#allocation4], 0
    // Predicated region
    $region2: #{tpu_custom_call.1} parent=1 // pred_check
      _
    $region3: #{tpu_custom_call.1} parent=1 // pred_check_branch
      %9 = sbr.rel (0) target = $region5
    $region4: #{tpu_custom_call.1} parent=1 // pred_region
      %s11 = ssub.s32 2048, 2048
      %12 = vsyncadd [#allocation3], %s11
      %s13 = sshll.u32 [#allocation2], 4
      %s14 = int_to_ptr.vmem [resolvable:$true] %s13
      %19 = dma.hbm_to_vmem [thread:$0]  %s0, 2048, %s14, [#allocation3], 128, 128, 8
    $region5: #{tpu_custom_call.1} parent=1 // pred_fallthru
      _
    // Predicated region
    $region6: #{tpu_custom_call.1} parent=1 // pred_check
      _
    $region7: #{tpu_custom_call.1} parent=1 // pred_check_branch
      %21 = sbr.rel (0) target = $region9
    $region8: #{tpu_custom_call.1} parent=1 // pred_region
      %22 = dma.done [#allocation3], 2048
    $region9: #{tpu_custom_call.1} parent=1 // pred_fallthru
      _
    %v23 = vld [vmem:[#allocation2] sm:$0xff]
    %v24 = vld [vmem:[#allocation2 + $0x8] sm:$0xff]
    %v25 = vld [vmem:[#allocation2 + $0x10] sm:$0xff]
    %v26 = vld [vmem:[#allocation2 + $0x18] sm:$0xff]
    %v27 = vld [vmem:[#allocation2 + $0x20] sm:$0xff]
    %v28 = vld [vmem:[#allocation2 + $0x28] sm:$0xff]
    %v29 = vld [vmem:[#allocation2 + $0x30] sm:$0xff]
    %v30 = vld [vmem:[#allocation2 + $0x38] sm:$0xff]
    %v31 = vld [vmem:[#allocation2 + $0x40] sm:$0xff]
    %v32 = vld [vmem:[#allocation2 + $0x48] sm:$0xff]
    %v33 = vld [vmem:[#allocation2 + $0x50] sm:$0xff]
    %v34 = vld [vmem:[#allocation2 + $0x58] sm:$0xff]
    %v35 = vld [vmem:[#allocation2 + $0x60] sm:$0xff]
    %v36 = vld [vmem:[#allocation2 + $0x68] sm:$0xff]
    %v37 = vld [vmem:[#allocation2 + $0x70] sm:$0xff]
    %v38 = vld [vmem:[#allocation2 + $0x78] sm:$0xff]
    %v39 = vmax.f32 %v23, 0.0
    %v40 = vmax.f32 %v24, 0.0
    %v41 = vmax.f32 %v25, 0.0
    %v42 = vmax.f32 %v26, 0.0
    %v43 = vmax.f32 %v27, 0.0
    %v44 = vmax.f32 %v28, 0.0
    %v45 = vmax.f32 %v29, 0.0
    %v46 = vmax.f32 %v30, 0.0
    %v47 = vmax.f32 %v31, 0.0
    %v48 = vmax.f32 %v32, 0.0
    %v49 = vmax.f32 %v33, 0.0
    %v50 = vmax.f32 %v34, 0.0
    %v51 = vmax.f32 %v35, 0.0
    %v52 = vmax.f32 %v36, 0.0
    %v53 = vmax.f32 %v37, 0.0
    %v54 = vmax.f32 %v38, 0.0
    %vm55 = vcmask 130048
    %56 = vst.msk [vmem:[#allocation5] sm:$0xff] %vm55, %v39
    %57 = vst.msk [vmem:[#allocation5 + $0x8] sm:$0xff] %vm55, %v40
    %58 = vst.msk [vmem:[#allocation5 + $0x10] sm:$0xff] %vm55, %v41
    %59 = vst.msk [vmem:[#allocation5 + $0x18] sm:$0xff] %vm55, %v42
    %60 = vst.msk [vmem:[#allocation5 + $0x20] sm:$0xff] %vm55, %v43
    %61 = vst.msk [vmem:[#allocation5 + $0x28] sm:$0xff] %vm55, %v44
    %62 = vst.msk [vmem:[#allocation5 + $0x30] sm:$0xff] %vm55, %v45
    %63 = vst.msk [vmem:[#allocation5 + $0x38] sm:$0xff] %vm55, %v46
    %64 = vst.msk [vmem:[#allocation5 + $0x40] sm:$0xff] %vm55, %v47
    %65 = vst.msk [vmem:[#allocation5 + $0x48] sm:$0xff] %vm55, %v48
    %66 = vst.msk [vmem:[#allocation5 + $0x50] sm:$0xff] %vm55, %v49
    %67 = vst.msk [vmem:[#allocation5 + $0x58] sm:$0xff] %vm55, %v50
    %68 = vst.msk [vmem:[#allocation5 + $0x60] sm:$0xff] %vm55, %v51
    %69 = vst.msk [vmem:[#allocation5 + $0x68] sm:$0xff] %vm55, %v52
    %70 = vst.msk [vmem:[#allocation5 + $0x70] sm:$0xff] %vm55, %v53
    %71 = vst.msk [vmem:[#allocation5 + $0x78] sm:$0xff] %vm55, %v54
    // Predicated region
    $region10: #{tpu_custom_call.1} parent=1 // pred_check
      _
    $region11: #{tpu_custom_call.1} parent=1 // pred_check_branch
      %73 = sbr.rel (0) target = $region13
    $region12: #{tpu_custom_call.1} parent=1 // pred_region
      %s75 = ssub.s32 2048, 2048
      %76 = vsyncadd [#allocation4], %s75
      %s77 = sshll.u32 [#allocation5], 4
      %s78 = int_to_ptr.vmem [resolvable:$true] %s77
      %83 = dma.vmem_to_hbm [thread:$0]  %s78, 2048, %s1, [#allocation4], 128, 128, 8
    $region13: #{tpu_custom_call.1} parent=1 // pred_fallthru
      _
    // Predicated region
    $region14: #{tpu_custom_call.1} parent=1 // pred_check
      _
    $region15: #{tpu_custom_call.1} parent=1 // pred_check_branch
      %85 = sbr.rel (0) target = $region17
    $region16: #{tpu_custom_call.1} parent=1 // pred_region
      %86 = dma.done [#allocation4], 2048
    $region17: #{tpu_custom_call.1} parent=1 // pred_fallthru
      _
    %87 = vsyncpa [#allocation3], 1
    %88 = vsyncpa [#allocation4], 1

</llo_original>
